<compile_context>
chip_gen: v6e
topology: v6e:2x2x1
jax: 0.10.0
libtpu: 0.0.40
codegen_flags: <defaults>
</compile_context>

<pallas_src>
import jax
import jax.numpy as jnp
from jax import lax
from jax.experimental import pallas as pl
from jax.experimental.pallas import tpu as pltpu


def _pointwise_kernel(x_ref, w_ref, scale_ref, shift_ref, o_ref):
    # x_ref:     (Bn, C_in, T)   f32 tile of flattened pixels (lane dim = spatial)
    # w_ref:     (C_out, C_in)   bf16 raw conv weight (resident across the grid)
    # scale_ref: (C_out, 1)      f32 BN scale  = gamma / sqrt(var + eps)
    # shift_ref: (C_out, 1)      f32 shift     = scale*(bias - mean) + beta
    # o_ref:     (Bn, C_out, T)  bf16 output tile (lane-dense, multiple of 128)
    w = w_ref[...]
    scale = scale_ref[...]
    shift = shift_ref[...]

    def body(b, carry):
        x = x_ref[b].astype(jnp.bfloat16)                         # in-kernel cast, no extra HBM pass
        acc = jnp.dot(w, x, preferred_element_type=jnp.float32)   # MXU, f32 accumulate
        y = acc * scale + shift                                   # f32 epilogue (BN)
        o_ref[b] = jnp.maximum(y, 0.0).astype(o_ref.dtype)        # ReLU + narrow store
        return carry

    lax.fori_loop(0, x_ref.shape[0], body, 0, unroll=True)


def _round_up(a, b):
    return (a + b - 1) // b * b


def _choose_tiling(N, C_in, C_out, HW, out_bytes=2,
                   target_step_bytes=1536 * 1024,
                   vmem_budget_bytes=32 * 1024 * 1024):
    """Pick (batch block Bn, spatial tile T).

    Aims for a per-grid-step DMA footprint of >= ~1.5 MiB (amortize the fixed
    per-step overhead) while keeping the double-buffered in+out footprint under
    a budget that leaves headroom below the 48 MiB vmem limit (weight, scale,
    shift and internal scratch are tiny by comparison)."""
    cin_rows = _round_up(max(C_in, 1), 8)                        # f32 sublane padding
    cout_rows = _round_up(max(C_out, 1), 16 if out_bytes == 2 else 8)
    per_col = cin_rows * 4 + cout_rows * out_bytes               # bytes / image / lane column
    hw_full = _round_up(HW, 128)

    # Batch-block small spatial extents so grid steps aren't tiny DMAs.
    bn = 1
    for d in range(1, N + 1):
        if N % d != 0:
            continue
        bn = d
        if d * hw_full * per_col >= target_step_bytes:
            break

    # Largest multiple-of-128 spatial tile fitting the double-buffered budget.
    max_cols = vmem_budget_bytes // (2 * bn * per_col)
    tile_hw = max(128, min(hw_full, (max_cols // 128) * 128))

    # v7x megacore: ensure >= 2 parallel grid steps whenever possible.
    if (N // bn) == 1 and pl.cdiv(HW, tile_hw) == 1 and hw_full >= 256:
        tile_hw = max(128, _round_up(hw_full // 2, 128))

    return bn, tile_hw


def pointwise_conv_forward(x_nchw, weight, bias, gamma, beta, run_mean, run_var,
                           eps=1e-5, out_dtype=jnp.bfloat16):
    """Conv2d(1x1) + BatchNorm2d(inference) + ReLU, NCHW in / NCHW out.

    x_nchw: (N, C_in, H, W) f32.  weight: (C_out, C_in, 1, 1).
    out_dtype defaults to bf16 (halves HBM write traffic for this memory-bound op);
    pass out_dtype=jnp.float32 for an exact-dtype match with the PyTorch module.
    """
    N, C_in, H, W = x_nchw.shape
    C_out = weight.shape[0]
    HW = H * W

    # Raw weight in bf16; BN is applied as an f32 scale/shift in the kernel epilogue.
    w_bf16 = weight.reshape(C_out, C_in).astype(jnp.bfloat16)
    scale = (gamma / jnp.sqrt(run_var + eps)).astype(jnp.float32)        # (C_out,)
    shift = (scale * (bias - run_mean) + beta).astype(jnp.float32)       # (C_out,)
    scale2d = scale.reshape(C_out, 1)
    shift2d = shift.reshape(C_out, 1)

    # Flatten spatial in place: contiguous NCHW -> free reshape, no copy / cast pass.
    x_flat = x_nchw.reshape(N, C_in, HW)

    out_bytes = jnp.dtype(out_dtype).itemsize
    bn, tile_hw = _choose_tiling(N, C_in, C_out, HW, out_bytes=out_bytes)
    grid = (pl.cdiv(N, bn), pl.cdiv(HW, tile_hw))

    out_flat = pl.pallas_call(
        _pointwise_kernel,
        out_shape=jax.ShapeDtypeStruct((N, C_out, HW), out_dtype),
        grid_spec=pltpu.PrefetchScalarGridSpec(
            num_scalar_prefetch=0,
            grid=grid,
            in_specs=[
                pl.BlockSpec((bn, C_in, tile_hw), lambda n, j: (n, 0, j)),
                pl.BlockSpec((C_out, C_in), lambda n, j: (0, 0)),
                pl.BlockSpec((C_out, 1), lambda n, j: (0, 0)),
                pl.BlockSpec((C_out, 1), lambda n, j: (0, 0)),
            ],
            out_specs=pl.BlockSpec((bn, C_out, tile_hw), lambda n, j: (n, 0, j)),
        ),
        compiler_params=pltpu.CompilerParams(
            dimension_semantics=("parallel", "parallel"),
            vmem_limit_bytes=48 * 1024 * 1024,
        ),
    )(x_flat, w_bf16, scale2d, shift2d)

    return out_flat.reshape(N, C_out, H, W)


def _reference(x_nchw, weight, bias, gamma, beta, run_mean, run_var, eps=1e-5):
    # Pure-JAX f32 reference of Conv2d(1x1) + BN(inference) + ReLU in NCHW.
    w = weight.reshape(weight.shape[0], weight.shape[1])          # (C_out, C_in)
    z = jnp.einsum("nchw,oc->nohw", x_nchw, w) + bias[None, :, None, None]
    zn = (z - run_mean[None, :, None, None]) / jnp.sqrt(run_var[None, :, None, None] + eps)
    y = gamma[None, :, None, None] * zn + beta[None, :, None, None]
    return jnp.maximum(y, 0.0)


if __name__ == "__main__":
    key = jax.random.PRNGKey(0)
    k_x, k_w, k_b, k_g, k_be, k_m, k_v = jax.random.split(key, 7)

    N, C_in, H, W = 2, 4, 16, 16
    C_out = 8

    x = jax.random.normal(k_x, (N, C_in, H, W), dtype=jnp.float32)
    weight = jax.random.normal(k_w, (C_out, C_in, 1, 1), dtype=jnp.float32) * 0.1
    bias = jax.random.normal(k_b, (C_out,), dtype=jnp.float32) * 0.1
    gamma = 1.0 + 0.1 * jax.random.normal(k_g, (C_out,), dtype=jnp.float32)
    beta = 0.1 * jax.random.normal(k_be, (C_out,), dtype=jnp.float32)
    run_mean = 0.1 * jax.random.normal(k_m, (C_out,), dtype=jnp.float32)
    run_var = jnp.abs(jax.random.normal(k_v, (C_out,), dtype=jnp.float32)) + 0.5

    out = pointwise_conv_forward(x, weight, bias, gamma, beta, run_mean, run_var)
    out = jax.block_until_ready(out)

    ref = _reference(x, weight, bias, gamma, beta, run_mean, run_var)
    assert out.shape == (N, C_out, H, W)
    # bf16 activations/weights/output -> relaxed tolerance vs the f32 reference.
    assert jnp.allclose(out.astype(jnp.float32), ref, atol=3e-2, rtol=3e-2)

    print("KERNEL_OK")
</pallas_src>

<mosaic_0001>
module attributes {stable_mosaic.version = 11 : i64} {
  func.func @_pointwise_kernel(%arg0: i32, %arg1: i32, %arg2: memref<2x4x128xf32, #tpu.memory_space<vmem>>, %arg3: memref<8x4xbf16, #tpu.memory_space<vmem>>, %arg4: memref<8x1xf32, #tpu.memory_space<vmem>>, %arg5: memref<8x1xf32, #tpu.memory_space<vmem>>, %arg6: memref<2x8x128xbf16, #tpu.memory_space<vmem>>) attributes {dimension_semantics = [#tpu.dimension_semantics<parallel>, #tpu.dimension_semantics<parallel>], iteration_bounds = array<i64: 1, 2>, scalar_prefetch = 0 : i64, scratch_operands = 0 : i64, tpu.core_type = #tpu.core_type<tc>, window_params = [{transform_indices = @transform_0, window_bounds = array<i64: 2, 4, 128>}, {pipeline_mode = #tpu.pipeline_mode<synchronous>, transform_indices = @transform_1, window_bounds = array<i64: 8, 4>}, {pipeline_mode = #tpu.pipeline_mode<synchronous>, transform_indices = @transform_2, window_bounds = array<i64: 8, 1>}, {pipeline_mode = #tpu.pipeline_mode<synchronous>, transform_indices = @transform_3, window_bounds = array<i64: 8, 1>}, {transform_indices = @transform_4, window_bounds = array<i64: 2, 8, 128>}]} {
    %c0 = arith.constant 0 : index
    %c0_0 = arith.constant 0 : index
    %0 = vector.load %arg3[%c0, %c0_0] : memref<8x4xbf16, #tpu.memory_space<vmem>>, vector<8x4xbf16>
    %c0_1 = arith.constant 0 : index
    %c0_2 = arith.constant 0 : index
    %1 = vector.load %arg4[%c0_1, %c0_2] : memref<8x1xf32, #tpu.memory_space<vmem>>, vector<8x1xf32>
    %c0_3 = arith.constant 0 : index
    %c0_4 = arith.constant 0 : index
    %2 = vector.load %arg5[%c0_3, %c0_4] : memref<8x1xf32, #tpu.memory_space<vmem>>, vector<8x1xf32>
    %c0_i32 = arith.constant 0 : i32
    %3 = arith.index_cast %c0_i32 : i32 to index
    %c0_5 = arith.constant 0 : index
    %c0_6 = arith.constant 0 : index
    %4 = vector.load %arg2[%3, %c0_5, %c0_6] : memref<2x4x128xf32, #tpu.memory_space<vmem>>, vector<1x4x128xf32>
    %5 = vector.shape_cast %4 : vector<1x4x128xf32> to vector<4x128xf32>
    %6 = arith.truncf %5 : vector<4x128xf32> to vector<4x128xbf16>
    %cst = arith.constant dense<0.000000e+00> : vector<8x128xf32>
    %7 = tpu.matmul %0, %6, %cst {dimension_numbers = #tpu.dot_dimension_numbers<[1], [0], [0], [1], [0, 0, 1, 1], [], []>} : vector<8x4xbf16>, vector<4x128xbf16>, vector<8x128xf32> -> vector<8x128xf32>
    %8 = vector.broadcast %1 : vector<8x1xf32> to vector<8x128xf32>
    %9 = arith.mulf %7, %8 : vector<8x128xf32>
    %10 = vector.broadcast %2 : vector<8x1xf32> to vector<8x128xf32>
    %11 = arith.addf %9, %10 : vector<8x128xf32>
    %cst_7 = arith.constant 0.000000e+00 : f32
    %12 = vector.broadcast %cst_7 : f32 to vector<8x128xf32>
    %13 = arith.maximumf %11, %12 : vector<8x128xf32>
    %14 = arith.truncf %13 : vector<8x128xf32> to vector<8x128xbf16>
    %15 = arith.index_cast %c0_i32 : i32 to index
    %c0_8 = arith.constant 0 : index
    %c0_9 = arith.constant 0 : index
    %16 = vector.load %arg6[%15, %c0_8, %c0_9] : memref<2x8x128xbf16, #tpu.memory_space<vmem>>, vector<1x8x128xbf16>
    %17 = vector.shape_cast %16 : vector<1x8x128xbf16> to vector<8x128xbf16>
    %18 = vector.shape_cast %14 : vector<8x128xbf16> to vector<1x8x128xbf16>
    tpu.vector_store %arg6[%15, %c0_8, %c0_9], %18 {strides = array<i32>} : memref<2x8x128xbf16, #tpu.memory_space<vmem>>, vector<1x8x128xbf16>,
    %c1_i32 = arith.constant 1 : i32
    %19 = arith.index_cast %c1_i32 : i32 to index
    %c0_10 = arith.constant 0 : index
    %c0_11 = arith.constant 0 : index
    %20 = vector.load %arg2[%19, %c0_10, %c0_11] : memref<2x4x128xf32, #tpu.memory_space<vmem>>, vector<1x4x128xf32>
    %21 = vector.shape_cast %20 : vector<1x4x128xf32> to vector<4x128xf32>
    %22 = arith.truncf %21 : vector<4x128xf32> to vector<4x128xbf16>
    %cst_12 = arith.constant dense<0.000000e+00> : vector<8x128xf32>
    %23 = tpu.matmul %0, %22, %cst_12 {dimension_numbers = #tpu.dot_dimension_numbers<[1], [0], [0], [1], [0, 0, 1, 1], [], []>} : vector<8x4xbf16>, vector<4x128xbf16>, vector<8x128xf32> -> vector<8x128xf32>
    %24 = vector.broadcast %1 : vector<8x1xf32> to vector<8x128xf32>
    %25 = arith.mulf %23, %24 : vector<8x128xf32>
    %26 = vector.broadcast %2 : vector<8x1xf32> to vector<8x128xf32>
    %27 = arith.addf %25, %26 : vector<8x128xf32>
    %cst_13 = arith.constant 0.000000e+00 : f32
    %28 = vector.broadcast %cst_13 : f32 to vector<8x128xf32>
    %29 = arith.maximumf %27, %28 : vector<8x128xf32>
    %30 = arith.truncf %29 : vector<8x128xf32> to vector<8x128xbf16>
    %31 = arith.index_cast %c1_i32 : i32 to index
    %c0_14 = arith.constant 0 : index
    %c0_15 = arith.constant 0 : index
    %32 = vector.load %arg6[%31, %c0_14, %c0_15] : memref<2x8x128xbf16, #tpu.memory_space<vmem>>, vector<1x8x128xbf16>
    %33 = vector.shape_cast %32 : vector<1x8x128xbf16> to vector<8x128xbf16>
    %34 = vector.shape_cast %30 : vector<8x128xbf16> to vector<1x8x128xbf16>
    tpu.vector_store %arg6[%31, %c0_14, %c0_15], %34 {strides = array<i32>} : memref<2x8x128xbf16, #tpu.memory_space<vmem>>, vector<1x8x128xbf16>,
    %c2_i32 = arith.constant 2 : i32
    return
  }
  func.func @transform_0(%arg0: i32, %arg1: i32) -> (i32, i32, i32) {
    %c0_i32 = arith.constant 0 : i32
    %c0_i32_0 = arith.constant 0 : i32
    return %arg0, %c0_i32, %arg1 : i32, i32, i32
  }
  func.func @transform_1(%arg0: i32, %arg1: i32) -> (i32, i32) {
    %c0_i32 = arith.constant 0 : i32
    %c0_i32_0 = arith.constant 0 : i32
    %c0_i32_1 = arith.constant 0 : i32
    return %c0_i32, %c0_i32_0 : i32, i32
  }
  func.func @transform_2(%arg0: i32, %arg1: i32) -> (i32, i32) {
    %c0_i32 = arith.constant 0 : i32
    %c0_i32_0 = arith.constant 0 : i32
    %c0_i32_1 = arith.constant 0 : i32
    return %c0_i32, %c0_i32_0 : i32, i32
  }
  func.func @transform_3(%arg0: i32, %arg1: i32) -> (i32, i32) {
    %c0_i32 = arith.constant 0 : i32
    %c0_i32_0 = arith.constant 0 : i32
    %c0_i32_1 = arith.constant 0 : i32
    return %c0_i32, %c0_i32_0 : i32, i32
  }
  func.func @transform_4(%arg0: i32, %arg1: i32) -> (i32, i32, i32) {
    %c0_i32 = arith.constant 0 : i32
    %c0_i32_0 = arith.constant 0 : i32
    return %arg0, %c0_i32, %arg1 : i32, i32, i32
  }
}

</mosaic_0001>

<llo_original>
// kernel: tpu_custom_call.1
$region0: #{tpu_custom_call.1}
  #allocation0 [shape = 'u32[]', space=smem, size = 0x4, offset = 0x4, fixed_abs, tag = 'smem constant byte address 0x4 - core index']
  #allocation1 [shape = 'u32[144,128]{1,0:T(1,128)}', space=vmem, size = 0x12000, scoped, tag = 'internal scratch']
  %s0 = inlined_call_operand.vmem [shape: f32[2,4,256], index: 0, kind: input, shape index: {}]
  %s1 = inlined_call_operand.vmem [shape: bf16[8,4], index: 1, kind: input, shape index: {}]
  %s2 = inlined_call_operand.vmem [shape: f32[8,1], index: 2, kind: input, shape index: {}]
  %s3 = inlined_call_operand.vmem [shape: f32[8,1], index: 3, kind: input, shape index: {}]
  %s4 = inlined_call_operand.hbm [shape: bf16[2,8,256], index: 4, kind: output, shape index: {}]
  %s5 = sld [smem:[#allocation0]]
  $region90: #{tpu_custom_call.1} parent=0
    _
  %s7 = ssub.s32 1, %s5
  %s8 = scalar_select 0, %s7, %s5
  $region1: #{tpu_custom_call.1} parent=0
    #allocation2 [shape = 'u8[8192]{0}', space=vmem, size = 0x2000, scoped, tag = 'input window, operand 0']
    #allocation3 [shape = 'u8[8192]{0}', space=vmem, size = 0x2000, scoped, tag = 'output window, operand 0']
    #allocation4 [shape = 's32[2]{0}', space=sflag, size = 0x8, scoped, tag = 'scoped memory for tpu_custom_call.1']
    %9 = vsyncpa [#allocation4], 0
    %s10 = scalar_lea.sflag [#allocation4], 1
    %11 = vsyncpa %s10, 0
    loop: start=0, step=1, limit=4
    $region2: #{tpu_custom_call.1} parent=1 // loop_pre_header
      _
    $region3: #{tpu_custom_call.1} parent=1 // loop_header
      %s13 = sphi 0, %s17
      %p14 = scmp.ge.s32.totalorder %s13, 4
      %s20 = sphi 0, %s32
      %s21 = sphi 0, %s28
      %s22 = sphi 0, %s20
      %s23 = sphi 0, %s21
      %s24 = sphi 0, %s22
      %s25 = sphi 0, %s23
      %s37 = sphi 0, %s39
      %s40 = sphi 0, %s37
      %s41 = sphi 0, %s40
      %s57 = sphi 0, %s41
      %s61 = sphi 0, %s61
      %s63 = sphi 0, %s61
      %s64 = sphi 0, %s63
      %s78 = sphi 0, %s64
      %s82 = sphi 0, %s82
      %s84 = sphi 0, %s82
      %s85 = sphi 0, %s84
      %s99 = sphi 0, %s85
      %s103 = sphi 0, %s103
      %s105 = sphi 0, %s103
      %s106 = sphi 0, %s105
      %s120 = sphi 0, %s106
      %s128 = sphi 0, %s130
      %s131 = sphi 0, %s128
      %s132 = sphi 0, %s131
      %s148 = sphi 0, %s132
    $region4: #{tpu_custom_call.1} parent=1 // loop_header_branch
      %16 = sbr.rel (%p14) target = $region8
    $region5: #{tpu_custom_call.1} parent=1 // loop_body
      %s18 = ssub.s32 %s13, 1
      %s19 = ssub.s32 %s13, 2
      %s26 = sadd.s32 1, %s21
      %p27 = scmp.ge.s32.totalorder %s26, 2
      %s28 = scalar_select %p27, 0, %s26
      %s29 = sadd.s32 1, %s20
      %s30 = scalar_select %p27, %s29, %s20
      %p31 = scmp.ge.s32.totalorder %s30, 1
      %s32 = scalar_select %p31, 0, %s30
      %s33 = ssub.s32 %s20, %s32
      %s34 = ssub.s32 %s21, %s28
      %s35 = sor.u32 %s33, %s34
      %p36 = scmp.eq.s32.totalorder %s35, 0
      %s38 = sadd.s32 %s37, 1
      %s39 = scalar_select %p36, %s37, %s38
      %p42 = pneg %p36
      %p43 = scmp.eq.s32.totalorder %s13, 1
      %p44 = por %p42, %p43
      %p45 = scmp.ne.s32.totalorder %s37, %s40
      %p46 = scmp.eq.s32.totalorder %s13, 0
      %p47 = por %p45, %p46
      %p48 = scmp.ne.s32.totalorder %s37, %s40
      %p49 = scmp.eq.s32.totalorder %s18, 1
      %p50 = por %p48, %p49
      %p51 = scmp.ne.s32.totalorder %s40, %s41
      %p52 = scmp.eq.s32.totalorder %s18, 0
      %p53 = por %p51, %p52
      %p54 = scmp.ne.s32.totalorder %s40, %s41
      %p55 = scmp.eq.s32.totalorder %s19, 1
      %p56 = por %p54, %p55
      %p58 = scmp.ne.s32.totalorder %s41, %s57
      %p59 = scmp.eq.s32.totalorder %s19, 0
      %p60 = por %p58, %p59
      %s62 = sadd.s32 %s61, 1
      %p65 = scmp.eq.s32.totalorder %s13, 1
      %p66 = scmp.ne.s32.totalorder %s61, %s63
      %p67 = scmp.eq.s32.totalorder %s13, 0
      %p68 = por %p66, %p67
      %p69 = scmp.ne.s32.totalorder %s61, %s63
      %p70 = scmp.eq.s32.totalorder %s18, 1
      %p71 = por %p69, %p70
      %p72 = scmp.ne.s32.totalorder %s63, %s64
      %p73 = scmp.eq.s32.totalorder %s18, 0
      %p74 = por %p72, %p73
      %p75 = scmp.ne.s32.totalorder %s63, %s64
      %p76 = scmp.eq.s32.totalorder %s19, 1
      %p77 = por %p75, %p76
      %p79 = scmp.ne.s32.totalorder %s64, %s78
      %p80 = scmp.eq.s32.totalorder %s19, 0
      %p81 = por %p79, %p80
      %s83 = sadd.s32 %s82, 1
      %p86 = scmp.eq.s32.totalorder %s13, 1
      %p87 = scmp.ne.s32.totalorder %s82, %s84
      %p88 = scmp.eq.s32.totalorder %s13, 0
      %p89 = por %p87, %p88
      %p90 = scmp.ne.s32.totalorder %s82, %s84
      %p91 = scmp.eq.s32.totalorder %s18, 1
      %p92 = por %p90, %p91
      %p93 = scmp.ne.s32.totalorder %s84, %s85
      %p94 = scmp.eq.s32.totalorder %s18, 0
      %p95 = por %p93, %p94
      %p96 = scmp.ne.s32.totalorder %s84, %s85
      %p97 = scmp.eq.s32.totalorder %s19, 1
      %p98 = por %p96, %p97
      %p100 = scmp.ne.s32.totalorder %s85, %s99
      %p101 = scmp.eq.s32.totalorder %s19, 0
      %p102 = por %p100, %p101
      %s104 = sadd.s32 %s103, 1
      %p107 = scmp.eq.s32.totalorder %s13, 1
      %p108 = scmp.ne.s32.totalorder %s103, %s105
      %p109 = scmp.eq.s32.totalorder %s13, 0
      %p110 = por %p108, %p109
      %p111 = scmp.ne.s32.totalorder %s103, %s105
      %p112 = scmp.eq.s32.totalorder %s18, 1
      %p113 = por %p111, %p112
      %p114 = scmp.ne.s32.totalorder %s105, %s106
      %p115 = scmp.eq.s32.totalorder %s18, 0
      %p116 = por %p114, %p115
      %p117 = scmp.ne.s32.totalorder %s105, %s106
      %p118 = scmp.eq.s32.totalorder %s19, 1
      %p119 = por %p117, %p118
      %p121 = scmp.ne.s32.totalorder %s106, %s120
      %p122 = scmp.eq.s32.totalorder %s19, 0
      %p123 = por %p121, %p122
      %s124 = ssub.s32 %s20, %s32
      %s125 = ssub.s32 %s21, %s28
      %s126 = sor.u32 %s124, %s125
      %p127 = scmp.eq.s32.totalorder %s126, 0
      %s129 = sadd.s32 %s128, 1
      %s130 = scalar_select %p127, %s128, %s129
      %p133 = pneg %p127
      %p134 = scmp.eq.s32.totalorder %s13, 1
      %p135 = por %p133, %p134
      %p136 = scmp.ne.s32.totalorder %s128, %s131
      %p137 = scmp.eq.s32.totalorder %s13, 0
      %p138 = por %p136, %p137
      %p139 = scmp.ne.s32.totalorder %s128, %s131
      %p140 = scmp.eq.s32.totalorder %s18, 1
      %p141 = por %p139, %p140
      %p142 = scmp.ne.s32.totalorder %s131, %s132
      %p143 = scmp.eq.s32.totalorder %s18, 0
      %p144 = por %p142, %p143
      %p145 = scmp.ne.s32.totalorder %s131, %s132
      %p146 = scmp.eq.s32.totalorder %s19, 1
      %p147 = por %p145, %p146
      %p149 = scmp.ne.s32.totalorder %s132, %s148
      %p150 = scmp.eq.s32.totalorder %s19, 0
      %p151 = por %p149, %p150
      %p152 = scmp.le.s32.totalorder 1, %s13
      %p153 = scmp.lt.s32.totalorder %s13, 3
      %p154 = pnand %p152, %p153
      %p155 = pneg %p154
      // Predicated region
      $region9: #{tpu_custom_call.1} parent=5 // pred_check
        _
      $region10: #{tpu_custom_call.1} parent=5 // pred_check_branch
        %157 = sbr.rel (%p154) target = $region12
      $region11: #{tpu_custom_call.1} parent=5 // pred_region
        %s158 = ssub.s32 %s13, 1
        // Predicated region
        $region13: #{tpu_custom_call.1} parent=11 // pred_check
          %p159 = pneg %p74
        $region14: #{tpu_custom_call.1} parent=11 // pred_check_branch
          %161 = sbr.rel (%p159) target = $region16
        $region15: #{tpu_custom_call.1} parent=11 // pred_region
          _
        $region16: #{tpu_custom_call.1} parent=11 // pred_fallthru
          _
        // Predicated region
        $region17: #{tpu_custom_call.1} parent=11 // pred_check
          %p162 = pneg %p95
        $region18: #{tpu_custom_call.1} parent=11 // pred_check_branch
          %164 = sbr.rel (%p162) target = $region20
        $region19: #{tpu_custom_call.1} parent=11 // pred_region
          _
        $region20: #{tpu_custom_call.1} parent=11 // pred_fallthru
          _
        // Predicated region
        $region21: #{tpu_custom_call.1} parent=11 // pred_check
          %p165 = pneg %p116
        $region22: #{tpu_custom_call.1} parent=11 // pred_check_branch
          %167 = sbr.rel (%p165) target = $region24
        $region23: #{tpu_custom_call.1} parent=11 // pred_region
          _
        $region24: #{tpu_custom_call.1} parent=11 // pred_fallthru
          _
      $region12: #{tpu_custom_call.1} parent=5 // pred_fallthru
        _
      %p168 = scmp.lt.s32.totalorder %s13, 2
      // Predicated region
      $region25: #{tpu_custom_call.1} parent=5 // pred_check
        %p169 = pneg %p168
      $region26: #{tpu_custom_call.1} parent=5 // pred_check_branch
        %171 = sbr.rel (%p169) target = $region28
      $region27: #{tpu_custom_call.1} parent=5 // pred_region
        // Predicated region
        $region29: #{tpu_custom_call.1} parent=27 // pred_check
          %p172 = pneg %p47
        $region30: #{tpu_custom_call.1} parent=27 // pred_check_branch
          %174 = sbr.rel (%p172) target = $region32
        $region31: #{tpu_custom_call.1} parent=27 // pred_region
          %s175 = sand.u32 %s37, 1
          %s176 = sand.u32 %s37, 1
          %s177 = smul.addr %s176, 8
          %s178 = scalar_lea.vmem [#allocation2], %s177
          %s179 = smul.u32 2, %s20
          %s180 = smul.addr %s179, 2
          %s181 = sadd.s32 %s21, %s180
          %s182 = smul.addr %s181, 4
          %s183 = scalar_lea.vmem %s0, %s182
          // Predicated region
          $region33: #{tpu_custom_call.1} parent=31 // pred_check
            _
          $region34: #{tpu_custom_call.1} parent=31 // pred_check_branch
            %185 = sbr.rel (0) target = $region36
          $region35: #{tpu_custom_call.1} parent=31 // pred_region
            // Predicated region
            $region37: #{tpu_custom_call.1} parent=35 // pred_check
              _
            $region38: #{tpu_custom_call.1} parent=35 // pred_check_branch
              %187 = sbr.rel target = $region40
            $region39: #{tpu_custom_call.1} parent=35 // pred_region
              // Predicated region
              $region52: #{tpu_custom_call.1} parent=39 // pred_check
                _
              $region53: #{tpu_custom_call.1} parent=39 // pred_check_branch
                %205 = sbr.rel (0) target = $region55
              $region54: #{tpu_custom_call.1} parent=39 // pred_region
                loop: start=0, step=1, limit=1
                $region56: #{tpu_custom_call.1} parent=54 // loop_pre_header
                  _
                $region57: #{tpu_custom_call.1} parent=54 // loop_header
                  %s207 = sphi 0, %s211
                  %p208 = scmp.ge.s32.totalorder %s207, 1
                  %s212 = sphi %s183, %s183
                  %s213 = sphi %s178, %s178
                $region58: #{tpu_custom_call.1} parent=54 // loop_header_branch
                  %210 = sbr.rel (%p208) target = $region62
                $region59: #{tpu_custom_call.1} parent=54 // loop_body
                  _
                $region60: #{tpu_custom_call.1} parent=54 // loop_footer
                  %s211 = sadd.s32 1, %s207
                $region61: #{tpu_custom_call.1} parent=54 // loop_footer_branch
                  %206 = sbr.rel target = $region57
                $region62: #{tpu_custom_call.1} parent=54 // loop_exit
                  _
                %s215 = ssub.s32 16, 1
                loop: start=0, step=1, limit=1
                $region63: #{tpu_custom_call.1} parent=54 // loop_pre_header
                  _
                $region64: #{tpu_custom_call.1} parent=54 // loop_header
                  %s217 = sphi 0, %s221
                  %p218 = scmp.ge.s32.totalorder %s217, 1
                  %s222 = sphi %s183, %s183
                  %s223 = sphi %s178, %s178
                $region65: #{tpu_custom_call.1} parent=54 // loop_header_branch
                  %220 = sbr.rel (%p218) target = $region69
                $region66: #{tpu_custom_call.1} parent=54 // loop_body
                  %v224 = vld [vmem:[%s222] sm:%s215]
                  %225 = vst [vmem:[%s223] sm:%s215] %v224
                  %v226 = vld [vmem:[%s222 + $0x8] sm:%s215]
                  %227 = vst [vmem:[%s223 + $0x4] sm:%s215] %v226
                $region67: #{tpu_custom_call.1} parent=54 // loop_footer
                  %s221 = sadd.s32 1, %s217
                $region68: #{tpu_custom_call.1} parent=54 // loop_footer_branch
                  %216 = sbr.rel target = $region64
                $region69: #{tpu_custom_call.1} parent=54 // loop_exit
                  _
              $region55: #{tpu_custom_call.1} parent=39 // pred_fallthru
                _
            $region40: #{tpu_custom_call.1} parent=35 // pred_fallthru
              _
            // Predicated region
            $region41: #{tpu_custom_call.1} parent=35 // pred_check
              _
            $region42: #{tpu_custom_call.1} parent=35 // pred_check_branch
              %189 = sbr.rel (0) target = $region44
            $region43: #{tpu_custom_call.1} parent=35 // pred_region
              %s191 = ssub.s32 16, 1
              loop: start=0, step=1, limit=1
              $region45: #{tpu_custom_call.1} parent=43 // loop_pre_header
                _
              $region46: #{tpu_custom_call.1} parent=43 // loop_header
                %s193 = sphi 0, %s197
                %p194 = scmp.ge.s32.totalorder %s193, 1
                %s198 = sphi %s183, %s183
                %s199 = sphi %s178, %s178
              $region47: #{tpu_custom_call.1} parent=43 // loop_header_branch
                %196 = sbr.rel (%p194) target = $region51
              $region48: #{tpu_custom_call.1} parent=43 // loop_body
                %v200 = vld [vmem:[%s198] sm:%s191]
                %201 = vst [vmem:[%s199] sm:%s191] %v200
                %v202 = vld [vmem:[%s198 + $0x8] sm:%s191]
                %203 = vst [vmem:[%s199 + $0x4] sm:%s191] %v202
              $region49: #{tpu_custom_call.1} parent=43 // loop_footer
                %s197 = sadd.s32 1, %s193
              $region50: #{tpu_custom_call.1} parent=43 // loop_footer_branch
                %192 = sbr.rel target = $region46
              $region51: #{tpu_custom_call.1} parent=43 // loop_exit
                _
            $region44: #{tpu_custom_call.1} parent=35 // pred_fallthru
              _
          $region36: #{tpu_custom_call.1} parent=31 // pred_fallthru
            _
          %228 = vnop
        $region32: #{tpu_custom_call.1} parent=27 // pred_fallthru
          _
      $region28: #{tpu_custom_call.1} parent=5 // pred_fallthru
        _
      %p229 = scmp.le.s32.totalorder 1, %s13
      %p230 = scmp.lt.s32.totalorder %s13, 3
      %p231 = pnand %p229, %p230
      %p232 = pneg %p231
      // Predicated region
      $region70: #{tpu_custom_call.1} parent=5 // pred_check
        _
      $region71: #{tpu_custom_call.1} parent=5 // pred_check_branch
        %234 = sbr.rel (%p231) target = $region73
      $region72: #{tpu_custom_call.1} parent=5 // pred_region
        %s235 = ssub.s32 %s13, 1
        %s236 = sand.u32 %s40, 1
        %s237 = sand.u32 %s40, 1
        %s238 = smul.addr %s237, 8
        %s239 = scalar_lea.vmem [#allocation2], %s238
        // Predicated region
        $region74: #{tpu_custom_call.1} parent=72 // pred_check
          %p240 = pneg %p53
        $region75: #{tpu_custom_call.1} parent=72 // pred_check_branch
          %242 = sbr.rel (%p240) target = $region77
        $region76: #{tpu_custom_call.1} parent=72 // pred_region
          _
        $region77: #{tpu_custom_call.1} parent=72 // pred_fallthru
          _
        %s243 = sand.u32 %s40, 1
        %s244 = sand.u32 %s40, 1
        %s245 = smul.addr %s244, 8
        %s246 = scalar_lea.vmem [#allocation2], %s245
        %p247 = pneg %p53
        %p248 = pneg %p50
        %p249 = pneg %p74
        %p250 = pneg %p71
        %p251 = pneg %p95
        %p252 = pneg %p92
        %p253 = pneg %p116
        %p254 = pneg %p113
        %p255 = pneg %p144
        %p256 = pneg %p141
        %s257 = sand.u32 %s131, 1
        %s258 = scalar_lea.sflag [#allocation4], %s257
        %s259 = sand.u32 %s131, 1
        %s260 = smul.addr %s259, 8
        %s261 = scalar_lea.vmem [#allocation3], %s260
        %s262 = smul.u32 2, %s22
        %s263 = smul.u32 2, %s22
        %v265 = vld [vmem:[%s1] sm:$0xf]
        %v266 = vld [vmem:[%s2] sm:$0xff]
        %v267 = vld [vmem:[%s3] sm:$0xff]
        %v268 = vld [vmem:[%s239] sm:$0xf]
        %v269 = vpack.c.bf16 %v268, %v268
        %vm270 = vcmask 31744
        %v272 = vsel %vm270, %v265, 0
        %vm274 = vcmask 1041408
        %v276 = vsel %vm274, %v269, 0
        %278 = vmatprep.subr.bf16.mxu0 0
        %279 = vmatpush1.bf16.msra.mxu0 0
        %280 = vmatprep.subr.bf16.mxu0 0
        %281 = vmatpush1.bf16.msra.mxu0 0
        %282 = vmatprep.subr.bf16.mxu0 0
        %283 = vmatpush1.bf16.msra.mxu0 0
        %284 = vmatprep.subr.bf16.mxu0 0
        %285 = vmatpush1.bf16.msra.mxu0 0
        %286 = vmatprep.subr.bf16.mxu0 0
        %287 = vmatpush1.bf16.msra.mxu0 0
        %288 = vmatprep.subr.bf16.mxu0 0
        %289 = vmatpush1.bf16.msra.mxu0 0
        %290 = vmatprep.subr.bf16.mxu0 0
        %291 = vmatpush1.bf16.msra.mxu0 0
        %292 = vmatprep.subr.bf16.mxu0 0
        %293 = vmatpush1.bf16.msra.mxu0 %v276
        %294 = vmatprep.subr.bf16.mxu0 0
        %295 = vmatpush2.bf16.msra.mxu0 0
        %296 = vmatprep.subr.bf16.mxu0 0
        %297 = vmatpush2.bf16.msra.mxu0 0
        %298 = vmatprep.subr.bf16.mxu0 0
        %299 = vmatpush2.bf16.msra.mxu0 0
        %300 = vmatprep.subr.bf16.mxu0 0
        %301 = vmatpush2.bf16.msra.mxu0 0
        %302 = vmatprep.subr.bf16.mxu0 0
        %303 = vmatpush2.bf16.msra.mxu0 0
        %304 = vmatprep.subr.bf16.mxu0 0
        %305 = vmatpush2.bf16.msra.mxu0 0
        %306 = vmatprep.subr.bf16.mxu0 0
        %307 = vmatpush2.bf16.msra.mxu0 0
        %308 = vmatprep.subr.bf16.mxu0 0
        %309 = vmatpush2.bf16.msra.mxu0 0
        %310 = vmatprep.mubr.bf16.mxu0 0
        %311 = vmatmul.mubr.bf16.gmra.mxu0 %v272
        %v312 = vpop.f32.mrf.mxu0
        %v313 = vadd.f32 0.0, %v312
        %v314 = vpop.f32.mrf.mxu0
        %v315 = vpop.f32.mrf.mxu0
        %v316 = vpop.f32.mrf.mxu0
        %317 = vdwg.mxu0
        %319 = vset.pattern.permute.xlu0 0
        %320 = vperm.xlu0 %319, %v266
        %v321 = vpop.permute.xlu0 %320
        %v323 = vmul.f32 %v313, %v321
        %325 = vset.pattern.permute.xlu0 0
        %326 = vperm.xlu0 %325, %v267
        %v327 = vpop.permute.xlu0 %326
        %v329 = vadd.f32 %v323, %v327
        %v330 = vmax.f32 %v329, 0.0
        %v331 = vpack.c.bf16 %v330, %v330
        %332 = vst [vmem:[%s261] sm:$0xf] %v331
        %s333 = scalar_lea.vmem %s239, 4 [#allocation2]
        %v334 = vld [vmem:[%s333] sm:$0xf]
        %v335 = vpack.c.bf16 %v334, %v334
        %v337 = vsel %vm274, %v335, 0
        %339 = vmatprep.subr.bf16.mxu0 0
        %340 = vmatpush1.bf16.msra.mxu0 0
        %341 = vmatprep.subr.bf16.mxu0 0
        %342 = vmatpush1.bf16.msra.mxu0 0
        %343 = vmatprep.subr.bf16.mxu0 0
        %344 = vmatpush1.bf16.msra.mxu0 0
        %345 = vmatprep.subr.bf16.mxu0 0
        %346 = vmatpush1.bf16.msra.mxu0 0
        %347 = vmatprep.subr.bf16.mxu0 0
        %348 = vmatpush1.bf16.msra.mxu0 0
        %349 = vmatprep.subr.bf16.mxu0 0
        %350 = vmatpush1.bf16.msra.mxu0 0
        %351 = vmatprep.subr.bf16.mxu0 0
        %352 = vmatpush1.bf16.msra.mxu0 0
        %353 = vmatprep.subr.bf16.mxu0 0
        %354 = vmatpush1.bf16.msra.mxu0 %v337
        %355 = vmatprep.subr.bf16.mxu0 0
        %356 = vmatpush2.bf16.msra.mxu0 0
        %357 = vmatprep.subr.bf16.mxu0 0
        %358 = vmatpush2.bf16.msra.mxu0 0
        %359 = vmatprep.subr.bf16.mxu0 0
        %360 = vmatpush2.bf16.msra.mxu0 0
        %361 = vmatprep.subr.bf16.mxu0 0
        %362 = vmatpush2.bf16.msra.mxu0 0
        %363 = vmatprep.subr.bf16.mxu0 0
        %364 = vmatpush2.bf16.msra.mxu0 0
        %365 = vmatprep.subr.bf16.mxu0 0
        %366 = vmatpush2.bf16.msra.mxu0 0
        %367 = vmatprep.subr.bf16.mxu0 0
        %368 = vmatpush2.bf16.msra.mxu0 0
        %369 = vmatprep.subr.bf16.mxu0 0
        %370 = vmatpush2.bf16.msra.mxu0 0
        %371 = vmatprep.mubr.bf16.mxu0 0
        %372 = vmatmul.mubr.bf16.gmra.mxu0 %v272
        %v373 = vpop.f32.mrf.mxu0
        %v374 = vadd.f32 0.0, %v373
        %v375 = vpop.f32.mrf.mxu0
        %v376 = vpop.f32.mrf.mxu0
        %v377 = vpop.f32.mrf.mxu0
        %378 = vdwg.mxu0
        %v379 = vmul.f32 %v374, %v321
        %v380 = vadd.f32 %v379, %v327
        %v381 = vmax.f32 %v380, 0.0
        %v382 = vpack.c.bf16 %v381, %v381
        %s383 = scalar_lea.vmem %s261, 4 [#allocation3]
        %384 = vst [vmem:[%s383] sm:$0xf] %v382
        %s385 = sand.u32 %s131, 1
        %s386 = scalar_lea.sflag [#allocation4], %s385
        %s387 = sand.u32 %s131, 1
        %s388 = smul.addr %s387, 8
        %s389 = scalar_lea.vmem [#allocation3], %s388
        // Predicated region
        $region78: #{tpu_custom_call.1} parent=72 // pred_check
          %p390 = pneg %p141
        $region79: #{tpu_custom_call.1} parent=72 // pred_check_branch
          %392 = sbr.rel (%p390) target = $region81
        $region80: #{tpu_custom_call.1} parent=72 // pred_region
          %s393 = smul.u32 2, %s22
          %s395 = ssub.s32 128, 128
          %396 = vsyncadd %s386, %s395
          %s397 = smul.addr %s393, 2
          %s398 = sadd.s32 %s23, %s397
          %s399 = smul.addr %s398, 64
          %s400 = scalar_lea.hbm %s4, %s399
          %s401 = sshll.u32 %s389, 4
          %s402 = int_to_ptr.vmem [resolvable:$true] %s401
          %407 = dma.vmem_to_hbm [thread:$0]  %s402, 128, %s400, %s386, 64, 128, 4
        $region81: #{tpu_custom_call.1} parent=72 // pred_fallthru
          _
      $region73: #{tpu_custom_call.1} parent=5 // pred_fallthru
        _
      %p408 = scmp.le.s32.totalorder 2, %s13
      // Predicated region
      $region82: #{tpu_custom_call.1} parent=5 // pred_check
        %p409 = pneg %p408
      $region83: #{tpu_custom_call.1} parent=5 // pred_check_branch
        %411 = sbr.rel (%p409) target = $region85
      $region84: #{tpu_custom_call.1} parent=5 // pred_region
        %s412 = ssub.s32 %s13, 2
        // Predicated region
        $region86: #{tpu_custom_call.1} parent=84 // pred_check
          %p413 = pneg %p147
        $region87: #{tpu_custom_call.1} parent=84 // pred_check_branch
          %415 = sbr.rel (%p413) target = $region89
        $region88: #{tpu_custom_call.1} parent=84 // pred_region
          %s416 = sand.u32 %s132, 1
          %s417 = scalar_lea.sflag [#allocation4], %s416
          %s418 = sand.u32 %s132, 1
          %s419 = smul.addr %s418, 8
          %s420 = scalar_lea.vmem [#allocation3], %s419
          %421 = dma.done %s417, 128
        $region89: #{tpu_custom_call.1} parent=84 // pred_fallthru
          _
      $region85: #{tpu_custom_call.1} parent=5 // pred_fallthru
        _
    $region6: #{tpu_custom_call.1} parent=1 // loop_footer
      %s17 = sadd.s32 1, %s13
    $region7: #{tpu_custom_call.1} parent=1 // loop_footer_branch
      %12 = sbr.rel target = $region3
    $region8: #{tpu_custom_call.1} parent=1 // loop_exit
      _
    %422 = vsyncpa [#allocation4], 1
    %s423 = scalar_lea.sflag [#allocation4], 1
    %424 = vsyncpa %s423, 1

</llo_original>
